<compile_context>
chip_gen: v6e
topology: v6e:2x2x1
jax: 0.10.0
libtpu: 0.0.40
codegen_flags: <defaults>
</compile_context>

<pallas_src>
import functools

import jax
import jax.numpy as jnp
from jax.experimental import pallas as pl
from jax.experimental.pallas import tpu as pltpu

TRAP_DIM = 8
N_SCALARS = 3                         # voltage, thickness, pulsewidth
IN_FEATURES = TRAP_DIM + N_SCALARS    # 11
PADDED_IN = 16                        # lane-padded input feature dim (zeros 11..15)
HIDDEN_DIM = 128
LATENT_DIM = 64
NUM_LAYERS = 3                        # hidden layers; final projection is extra


def _round_up(x: int, m: int) -> int:
    return ((x + m - 1) // m) * m


def _gelu(x, use_tanh: bool):
    if use_tanh:
        # tanh-approximate GELU: tanh maps to the EUP (otherwise-idle bundle
        # slot) instead of a long erf polynomial on the VALU.  ~1e-3 drift vs
        # torch.nn.GELU's exact erf form, so off by default.
        return 0.5 * x * (1.0 + jnp.tanh(0.7978845608028654
                                         * (x + 0.044715 * x * x * x)))
    # Exact erf GELU (torch.nn.GELU default).  Python float constants only —
    # no captured jax-array constants in the kernel.
    return 0.5 * x * (1.0 + jax.lax.erf(x * 0.7071067811865476))


def _encoder_kernel(x_ref, w0_ref, b0_ref, w1_ref, b1_ref, w2_ref, b2_ref,
                    wf_ref, bf_ref, out_ref, *, use_tanh_gelu: bool):
    mm_dtype = w0_ref.dtype          # bf16 (fast path) or f32 (exact path)

    # ---- layer 0: single small MXU dot over the padded [TM, 16] input ------
    x = x_ref[...]
    h = jnp.dot(x.astype(mm_dtype), w0_ref[...],
                preferred_element_type=jnp.float32) + b0_ref[...]
    h = _gelu(h, use_tanh_gelu)
    x_skip = h                                            # i=0 skip capture

    # ---- layer 1 ------------------------------------------------------------
    h = jnp.dot(h.astype(mm_dtype), w1_ref[...],
                preferred_element_type=jnp.float32) + b1_ref[...]
    h = _gelu(h, use_tanh_gelu)

    # ---- layer 2 (i=2 -> add skip from layer 0) -----------------------------
    h = jnp.dot(h.astype(mm_dtype), w2_ref[...],
                preferred_element_type=jnp.float32) + b2_ref[...]
    h = _gelu(h, use_tanh_gelu) + x_skip

    # ---- final linear, no activation ----------------------------------------
    out = jnp.dot(h.astype(mm_dtype), wf_ref[...],
                  preferred_element_type=jnp.float32) + bf_ref[...]
    out_ref[...] = out.astype(out_ref.dtype)


def trap_parameter_encoder(trap_params, voltage, thickness, pulsewidth, params,
                           *, tile_m: int = 4096,
                           use_bf16_matmul: bool = True,
                           use_tanh_gelu: bool = False):
    """Batch-tiled fused MLP.  Weights stay VMEM-resident across the grid."""
    if voltage.ndim == 1:
        voltage = voltage[:, None]
    if thickness.ndim == 1:
        thickness = thickness[:, None]
    if pulsewidth.ndim == 1:
        pulsewidth = pulsewidth[:, None]

    B = trap_params.shape[0]
    w0, b0, w1, b1, w2, b2, wf, bf = params

    # [B, 16] device-parameter matrix: [trap(8) | v | t | p | zero-pad(5)].
    # The matching zero rows are appended to W0 so the padding contributes 0.
    x = jnp.concatenate(
        [trap_params.astype(jnp.float32),
         voltage.astype(jnp.float32),
         thickness.astype(jnp.float32),
         pulsewidth.astype(jnp.float32),
         jnp.zeros((B, PADDED_IN - IN_FEATURES), jnp.float32)], axis=-1)

    mm_dtype = jnp.bfloat16 if use_bf16_matmul else jnp.float32
    w0p = jnp.concatenate(
        [jnp.asarray(w0, jnp.float32),
         jnp.zeros((PADDED_IN - IN_FEATURES, HIDDEN_DIM), jnp.float32)],
        axis=0).astype(mm_dtype)                              # [16, 128]
    w1c = jnp.asarray(w1, jnp.float32).astype(mm_dtype)       # [128, 128]
    w2c = jnp.asarray(w2, jnp.float32).astype(mm_dtype)       # [128, 128]
    wfc = jnp.asarray(wf, jnp.float32).astype(mm_dtype)       # [128, 64]
    b0c = jnp.asarray(b0, jnp.float32).reshape(1, HIDDEN_DIM)
    b1c = jnp.asarray(b1, jnp.float32).reshape(1, HIDDEN_DIM)
    b2c = jnp.asarray(b2, jnp.float32).reshape(1, HIDDEN_DIM)
    bfc = jnp.asarray(bf, jnp.float32).reshape(1, LATENT_DIM)

    # ----- batch tiling (no jnp.pad: ragged last block handled by Pallas) ----
    rows = _round_up(max(B, 1), 8)
    # >= 2 grid steps whenever the batch allows it, so the "parallel" batch
    # axis actually shards across both TensorCores on v7x; big tiles otherwise
    # to amortize the ~0.35us/step pipeline overhead on v5e/v6e.
    n_steps = max(2 if rows >= 16 else 1, pl.cdiv(rows, tile_m))
    tm = min(tile_m, _round_up(pl.cdiv(rows, n_steps), 8))
    grid = (pl.cdiv(B, tm),)

    # ----- cost estimate (advisory) -------------------------------------------
    flops = 2 * B * (PADDED_IN * HIDDEN_DIM
                     + 2 * HIDDEN_DIM * HIDDEN_DIM
                     + HIDDEN_DIM * LATENT_DIM)
    transcendentals = NUM_LAYERS * B * HIDDEN_DIM
    weight_bytes = sum(int(a.size) * a.dtype.itemsize
                       for a in (w0p, w1c, w2c, wfc, b0c, b1c, b2c, bfc))
    bytes_accessed = B * (PADDED_IN + LATENT_DIM) * 4 + weight_bytes
    cost = pl.CostEstimate(flops=int(flops),
                           transcendentals=int(transcendentals),
                           bytes_accessed=int(bytes_accessed))

    # ----- VMEM budget: need + margin, below v7x's 64 MiB physical cap --------
    est_vmem = (2 * tm * (PADDED_IN + LATENT_DIM) * 4   # double-buffered in/out tiles
                + 12 * tm * HIDDEN_DIM * 4              # live f32 intermediates + slack
                + 4 * weight_bytes                      # resident weight blocks
                + (4 << 20))                            # fixed headroom
    vmem_limit = int(min(48 << 20, max(16 << 20, est_vmem)))

    def batch_spec(feat):
        # activation block: tiles the batch axis, full feature axis
        return pl.BlockSpec((tm, feat), lambda i: (i, 0))

    def resident(a):
        # weight / bias block: same block index every grid step -> DMA'd once
        return pl.BlockSpec(a.shape, lambda i: (0, 0))

    kernel = functools.partial(_encoder_kernel, use_tanh_gelu=use_tanh_gelu)

    out = pl.pallas_call(
        kernel,
        out_shape=jax.ShapeDtypeStruct((B, LATENT_DIM), jnp.float32),
        grid=grid,
        in_specs=[
            batch_spec(PADDED_IN),                 # x = [trap|v|t|p|pad]
            resident(w0p), resident(b0c),
            resident(w1c), resident(b1c),
            resident(w2c), resident(b2c),
            resident(wfc), resident(bfc),
        ],
        out_specs=batch_spec(LATENT_DIM),
        compiler_params=pltpu.CompilerParams(
            dimension_semantics=("parallel",),     # megacore batch sharding
            vmem_limit_bytes=vmem_limit,
        ),
        cost_estimate=cost,
    )(x, w0p, b0c, w1c, b1c, w2c, b2c, wfc, bfc)

    return out


def init_params(key):
    """Deterministic synthetic weights (shapes match FullyConnected(11->128x3->64))."""
    ks = jax.random.split(key, 8)

    def lin(kw, fan_in, fan_out):
        scale = 1.0 / jnp.sqrt(jnp.float32(fan_in))
        return jax.random.uniform(kw, (fan_in, fan_out), jnp.float32, -scale, scale)

    w0 = lin(ks[0], IN_FEATURES, HIDDEN_DIM)
    w1 = lin(ks[1], HIDDEN_DIM, HIDDEN_DIM)
    w2 = lin(ks[2], HIDDEN_DIM, HIDDEN_DIM)
    wf = lin(ks[3], HIDDEN_DIM, LATENT_DIM)
    b0 = 0.01 * jax.random.normal(ks[4], (1, HIDDEN_DIM), jnp.float32)
    b1 = 0.01 * jax.random.normal(ks[5], (1, HIDDEN_DIM), jnp.float32)
    b2 = 0.01 * jax.random.normal(ks[6], (1, HIDDEN_DIM), jnp.float32)
    bf = 0.01 * jax.random.normal(ks[7], (1, LATENT_DIM), jnp.float32)
    return (w0, b0, w1, b1, w2, b2, wf, bf)


def reference_forward(trap_params, voltage, thickness, pulsewidth, params):
    """Pure-JAX reference matching PhysicsNeMo FullyConnected with skip_connections."""
    x = jnp.concatenate([trap_params, voltage[:, None], thickness[:, None],
                         pulsewidth[:, None]], axis=-1).astype(jnp.float32)
    w0, b0, w1, b1, w2, b2, wf, bf = params
    g = lambda z: 0.5 * z * (1.0 + jax.lax.erf(z / jnp.sqrt(jnp.float32(2.0))))
    h = g(x @ w0 + b0)
    x_skip = h
    h = g(h @ w1 + b1)
    h = g(h @ w2 + b2) + x_skip
    return h @ wf + bf


if __name__ == "__main__":
    key = jax.random.PRNGKey(0)
    k_p, k_t, k_v, k_th, k_pw = jax.random.split(key, 5)

    B = 4
    params = init_params(k_p)
    trap_params = jax.random.normal(k_t, (B, TRAP_DIM), jnp.float32)
    voltage = jax.random.normal(k_v, (B,), jnp.float32)
    thickness = jax.random.normal(k_th, (B,), jnp.float32)
    pulsewidth = jax.random.normal(k_pw, (B,), jnp.float32)

    ref = reference_forward(trap_params, voltage, thickness, pulsewidth, params)

    # Exact-parity path: f32 MXU + exact erf GELU.
    latent_f32 = trap_parameter_encoder(trap_params, voltage, thickness, pulsewidth,
                                        params, use_bf16_matmul=False)
    latent_f32 = jax.block_until_ready(latent_f32)
    assert latent_f32.shape == (B, LATENT_DIM)
    assert jnp.allclose(latent_f32, ref, atol=1e-5, rtol=1e-5), "f32 path mismatch vs reference"

    # Fast default path: bf16 into the MXU with f32 accumulation.
    latent_fast = trap_parameter_encoder(trap_params, voltage, thickness, pulsewidth, params)
    latent_fast = jax.block_until_ready(latent_fast)
    assert latent_fast.shape == (B, LATENT_DIM)
    assert jnp.allclose(latent_fast, ref, atol=5e-2, rtol=5e-2), "bf16 path drifted too far"

    print("KERNEL_OK")
</pallas_src>

<mosaic_0001>
module attributes {stable_mosaic.version = 11 : i64} {
  func.func @_encoder_kernel(%arg0: i32, %arg1: memref<8x16xf32, #tpu.memory_space<vmem>>, %arg2: memref<16x128xf32, #tpu.memory_space<vmem>>, %arg3: memref<1x128xf32, #tpu.memory_space<vmem>>, %arg4: memref<128x128xf32, #tpu.memory_space<vmem>>, %arg5: memref<1x128xf32, #tpu.memory_space<vmem>>, %arg6: memref<128x128xf32, #tpu.memory_space<vmem>>, %arg7: memref<1x128xf32, #tpu.memory_space<vmem>>, %arg8: memref<128x64xf32, #tpu.memory_space<vmem>>, %arg9: memref<1x64xf32, #tpu.memory_space<vmem>>, %arg10: memref<8x64xf32, #tpu.memory_space<vmem>>) attributes {dimension_semantics = [#tpu.dimension_semantics<parallel>], iteration_bounds = array<i64: 1>, scalar_prefetch = 0 : i64, scratch_operands = 0 : i64, tpu.core_type = #tpu.core_type<tc>, window_params = [{transform_indices = @transform_0, window_bounds = array<i64: 8, 16>}, {pipeline_mode = #tpu.pipeline_mode<synchronous>, transform_indices = @transform_1, window_bounds = array<i64: 16, 128>}, {pipeline_mode = #tpu.pipeline_mode<synchronous>, transform_indices = @transform_2, window_bounds = array<i64: 1, 128>}, {pipeline_mode = #tpu.pipeline_mode<synchronous>, transform_indices = @transform_3, window_bounds = array<i64: 128, 128>}, {pipeline_mode = #tpu.pipeline_mode<synchronous>, transform_indices = @transform_4, window_bounds = array<i64: 1, 128>}, {pipeline_mode = #tpu.pipeline_mode<synchronous>, transform_indices = @transform_5, window_bounds = array<i64: 128, 128>}, {pipeline_mode = #tpu.pipeline_mode<synchronous>, transform_indices = @transform_6, window_bounds = array<i64: 1, 128>}, {pipeline_mode = #tpu.pipeline_mode<synchronous>, transform_indices = @transform_7, window_bounds = array<i64: 128, 64>}, {pipeline_mode = #tpu.pipeline_mode<synchronous>, transform_indices = @transform_8, window_bounds = array<i64: 1, 64>}, {transform_indices = @transform_9, window_bounds = array<i64: 8, 64>}]} {
    %c0 = arith.constant 0 : index
    %c0_0 = arith.constant 0 : index
    %0 = vector.load %arg1[%c0, %c0_0] : memref<8x16xf32, #tpu.memory_space<vmem>>, vector<8x16xf32>
    %c0_1 = arith.constant 0 : index
    %c0_2 = arith.constant 0 : index
    %1 = vector.load %arg2[%c0_1, %c0_2] : memref<16x128xf32, #tpu.memory_space<vmem>>, vector<16x128xf32>
    %cst = arith.constant dense<0.000000e+00> : vector<8x128xf32>
    %2 = tpu.matmul %0, %1, %cst {dimension_numbers = #tpu.dot_dimension_numbers<[1], [0], [0], [1], [0, 0, 1, 1], [], []>} : vector<8x16xf32>, vector<16x128xf32>, vector<8x128xf32> -> vector<8x128xf32>
    %c0_3 = arith.constant 0 : index
    %c0_4 = arith.constant 0 : index
    %3 = vector.load %arg3[%c0_3, %c0_4] : memref<1x128xf32, #tpu.memory_space<vmem>>, vector<1x128xf32>
    %4 = vector.broadcast %3 : vector<1x128xf32> to vector<8x128xf32>
    %5 = arith.addf %2, %4 : vector<8x128xf32>
    %cst_5 = arith.constant 5.000000e-01 : f32
    %6 = vector.broadcast %cst_5 : f32 to vector<8x128xf32>
    %7 = arith.mulf %6, %5 : vector<8x128xf32>
    %cst_6 = arith.constant 0.707106769 : f32
    %8 = vector.broadcast %cst_6 : f32 to vector<8x128xf32>
    %9 = arith.mulf %5, %8 : vector<8x128xf32>
    %10 = math.erf %9 : vector<8x128xf32>
    %cst_7 = arith.constant 1.000000e+00 : f32
    %11 = vector.broadcast %cst_7 : f32 to vector<8x128xf32>
    %12 = arith.addf %11, %10 : vector<8x128xf32>
    %13 = arith.mulf %7, %12 : vector<8x128xf32>
    %c0_8 = arith.constant 0 : index
    %c0_9 = arith.constant 0 : index
    %14 = vector.load %arg4[%c0_8, %c0_9] : memref<128x128xf32, #tpu.memory_space<vmem>>, vector<128x128xf32>
    %cst_10 = arith.constant dense<0.000000e+00> : vector<8x128xf32>
    %15 = tpu.matmul %13, %14, %cst_10 {dimension_numbers = #tpu.dot_dimension_numbers<[1], [0], [0], [1], [0, 0, 1, 1], [], []>} : vector<8x128xf32>, vector<128x128xf32>, vector<8x128xf32> -> vector<8x128xf32>
    %c0_11 = arith.constant 0 : index
    %c0_12 = arith.constant 0 : index
    %16 = vector.load %arg5[%c0_11, %c0_12] : memref<1x128xf32, #tpu.memory_space<vmem>>, vector<1x128xf32>
    %17 = vector.broadcast %16 : vector<1x128xf32> to vector<8x128xf32>
    %18 = arith.addf %15, %17 : vector<8x128xf32>
    %cst_13 = arith.constant 5.000000e-01 : f32
    %19 = vector.broadcast %cst_13 : f32 to vector<8x128xf32>
    %20 = arith.mulf %19, %18 : vector<8x128xf32>
    %cst_14 = arith.constant 0.707106769 : f32
    %21 = vector.broadcast %cst_14 : f32 to vector<8x128xf32>
    %22 = arith.mulf %18, %21 : vector<8x128xf32>
    %23 = math.erf %22 : vector<8x128xf32>
    %cst_15 = arith.constant 1.000000e+00 : f32
    %24 = vector.broadcast %cst_15 : f32 to vector<8x128xf32>
    %25 = arith.addf %24, %23 : vector<8x128xf32>
    %26 = arith.mulf %20, %25 : vector<8x128xf32>
    %c0_16 = arith.constant 0 : index
    %c0_17 = arith.constant 0 : index
    %27 = vector.load %arg6[%c0_16, %c0_17] : memref<128x128xf32, #tpu.memory_space<vmem>>, vector<128x128xf32>
    %cst_18 = arith.constant dense<0.000000e+00> : vector<8x128xf32>
    %28 = tpu.matmul %26, %27, %cst_18 {dimension_numbers = #tpu.dot_dimension_numbers<[1], [0], [0], [1], [0, 0, 1, 1], [], []>} : vector<8x128xf32>, vector<128x128xf32>, vector<8x128xf32> -> vector<8x128xf32>
    %c0_19 = arith.constant 0 : index
    %c0_20 = arith.constant 0 : index
    %29 = vector.load %arg7[%c0_19, %c0_20] : memref<1x128xf32, #tpu.memory_space<vmem>>, vector<1x128xf32>
    %30 = vector.broadcast %29 : vector<1x128xf32> to vector<8x128xf32>
    %31 = arith.addf %28, %30 : vector<8x128xf32>
    %cst_21 = arith.constant 5.000000e-01 : f32
    %32 = vector.broadcast %cst_21 : f32 to vector<8x128xf32>
    %33 = arith.mulf %32, %31 : vector<8x128xf32>
    %cst_22 = arith.constant 0.707106769 : f32
    %34 = vector.broadcast %cst_22 : f32 to vector<8x128xf32>
    %35 = arith.mulf %31, %34 : vector<8x128xf32>
    %36 = math.erf %35 : vector<8x128xf32>
    %cst_23 = arith.constant 1.000000e+00 : f32
    %37 = vector.broadcast %cst_23 : f32 to vector<8x128xf32>
    %38 = arith.addf %37, %36 : vector<8x128xf32>
    %39 = arith.mulf %33, %38 : vector<8x128xf32>
    %40 = arith.addf %39, %13 : vector<8x128xf32>
    %c0_24 = arith.constant 0 : index
    %c0_25 = arith.constant 0 : index
    %41 = vector.load %arg8[%c0_24, %c0_25] : memref<128x64xf32, #tpu.memory_space<vmem>>, vector<128x64xf32>
    %cst_26 = arith.constant dense<0.000000e+00> : vector<8x64xf32>
    %42 = tpu.matmul %40, %41, %cst_26 {dimension_numbers = #tpu.dot_dimension_numbers<[1], [0], [0], [1], [0, 0, 1, 1], [], []>} : vector<8x128xf32>, vector<128x64xf32>, vector<8x64xf32> -> vector<8x64xf32>
    %c0_27 = arith.constant 0 : index
    %c0_28 = arith.constant 0 : index
    %43 = vector.load %arg9[%c0_27, %c0_28] : memref<1x64xf32, #tpu.memory_space<vmem>>, vector<1x64xf32>
    %44 = vector.broadcast %43 : vector<1x64xf32> to vector<8x64xf32>
    %45 = arith.addf %42, %44 : vector<8x64xf32>
    %c0_29 = arith.constant 0 : index
    %c0_30 = arith.constant 0 : index
    %46 = vector.load %arg10[%c0_29, %c0_30] : memref<8x64xf32, #tpu.memory_space<vmem>>, vector<8x64xf32>
    tpu.vector_store %arg10[%c0_29, %c0_30], %45 {strides = array<i32>} : memref<8x64xf32, #tpu.memory_space<vmem>>, vector<8x64xf32>,
    return
  }
  func.func @transform_0(%arg0: i32) -> (i32, i32) {
    %c0_i32 = arith.constant 0 : i32
    %c0_i32_0 = arith.constant 0 : i32
    return %arg0, %c0_i32 : i32, i32
  }
  func.func @transform_1(%arg0: i32) -> (i32, i32) {
    %c0_i32 = arith.constant 0 : i32
    %c0_i32_0 = arith.constant 0 : i32
    %c0_i32_1 = arith.constant 0 : i32
    return %c0_i32, %c0_i32_0 : i32, i32
  }
  func.func @transform_2(%arg0: i32) -> (i32, i32) {
    %c0_i32 = arith.constant 0 : i32
    %c0_i32_0 = arith.constant 0 : i32
    %c0_i32_1 = arith.constant 0 : i32
    return %c0_i32, %c0_i32_0 : i32, i32
  }
  func.func @transform_3(%arg0: i32) -> (i32, i32) {
    %c0_i32 = arith.constant 0 : i32
    %c0_i32_0 = arith.constant 0 : i32
    %c0_i32_1 = arith.constant 0 : i32
    return %c0_i32, %c0_i32_0 : i32, i32
  }
  func.func @transform_4(%arg0: i32) -> (i32, i32) {
    %c0_i32 = arith.constant 0 : i32
    %c0_i32_0 = arith.constant 0 : i32
    %c0_i32_1 = arith.constant 0 : i32
    return %c0_i32, %c0_i32_0 : i32, i32
  }
  func.func @transform_5(%arg0: i32) -> (i32, i32) {
    %c0_i32 = arith.constant 0 : i32
    %c0_i32_0 = arith.constant 0 : i32
    %c0_i32_1 = arith.constant 0 : i32
    return %c0_i32, %c0_i32_0 : i32, i32
  }
  func.func @transform_6(%arg0: i32) -> (i32, i32) {
    %c0_i32 = arith.constant 0 : i32
    %c0_i32_0 = arith.constant 0 : i32
    %c0_i32_1 = arith.constant 0 : i32
    return %c0_i32, %c0_i32_0 : i32, i32
  }
  func.func @transform_7(%arg0: i32) -> (i32, i32) {
    %c0_i32 = arith.constant 0 : i32
    %c0_i32_0 = arith.constant 0 : i32
    %c0_i32_1 = arith.constant 0 : i32
    return %c0_i32, %c0_i32_0 : i32, i32
  }
  func.func @transform_8(%arg0: i32) -> (i32, i32) {
    %c0_i32 = arith.constant 0 : i32
    %c0_i32_0 = arith.constant 0 : i32
    %c0_i32_1 = arith.constant 0 : i32
    return %c0_i32, %c0_i32_0 : i32, i32
  }
  func.func @transform_9(%arg0: i32) -> (i32, i32) {
    %c0_i32 = arith.constant 0 : i32
    %c0_i32_0 = arith.constant 0 : i32
    return %arg0, %c0_i32 : i32, i32
  }
}

</mosaic_0001>

<llo_original>
// kernel: tpu_custom_call.1
$region0: #{tpu_custom_call.1}
  #allocation0 [shape = 'u32[]', space=smem, size = 0x4, offset = 0x4, fixed_abs, tag = 'smem constant byte address 0x4 - core index']
  #allocation1 [shape = 'u32[144,128]{1,0:T(1,128)}', space=vmem, size = 0x12000, scoped, tag = 'internal scratch']
  %s0 = inlined_call_operand.vmem [shape: f32[4,16], index: 0, kind: input, shape index: {}]
  %s1 = inlined_call_operand.vmem [shape: f32[16,128], index: 1, kind: input, shape index: {}]
  %s2 = inlined_call_operand.vmem [shape: f32[1,128], index: 2, kind: input, shape index: {}]
  %s3 = inlined_call_operand.vmem [shape: f32[128,128], index: 3, kind: input, shape index: {}]
  %s4 = inlined_call_operand.vmem [shape: f32[1,128], index: 4, kind: input, shape index: {}]
  %s5 = inlined_call_operand.hbm [shape: f32[128,128], index: 5, kind: input, shape index: {}]
  %s6 = inlined_call_operand.vmem [shape: f32[1,128], index: 6, kind: input, shape index: {}]
  %s7 = inlined_call_operand.vmem [shape: f32[128,64], index: 7, kind: input, shape index: {}]
  %s8 = inlined_call_operand.vmem [shape: f32[1,64], index: 8, kind: input, shape index: {}]
  %s9 = inlined_call_operand.hbm [shape: f32[4,64], index: 9, kind: output, shape index: {}]
  %s10 = sld [smem:[#allocation0]]
  $region50: #{tpu_custom_call.1} parent=0
    _
  %s12 = ssub.s32 1, %s10
  %s13 = scalar_select 0, %s12, %s10
  $region1: #{tpu_custom_call.1} parent=0
    #allocation2 [shape = 'u8[65536]{0}', space=vmem, size = 0x10000, scoped, tag = 'input window, operand 5, single buffered']
    #allocation3 [shape = 's32[1]{0}', space=sflag, size = 0x4, scoped, tag = 'scoped memory for tpu_custom_call.1']
    #allocation4 [shape = 's32[1]{0}', space=sflag, size = 0x4, scoped, tag = 'scoped memory for tpu_custom_call.1']
    #allocation5 [shape = 'u8[4096]{0}', space=vmem, size = 0x1000, scoped, tag = 'output window, operand 0, single buffered']
    %14 = vsyncpa [#allocation3], 0
    %15 = vsyncpa [#allocation4], 0
    // Predicated region
    $region2: #{tpu_custom_call.1} parent=1 // pred_check
      _
    $region3: #{tpu_custom_call.1} parent=1 // pred_check_branch
      %17 = sbr.rel (0) target = $region5
    $region4: #{tpu_custom_call.1} parent=1 // pred_region
      _
    $region5: #{tpu_custom_call.1} parent=1 // pred_fallthru
      _
    // Predicated region
    $region6: #{tpu_custom_call.1} parent=1 // pred_check
      _
    $region7: #{tpu_custom_call.1} parent=1 // pred_check_branch
      %19 = sbr.rel (0) target = $region9
    $region8: #{tpu_custom_call.1} parent=1 // pred_region
      _
    $region9: #{tpu_custom_call.1} parent=1 // pred_fallthru
      _
    // Predicated region
    $region10: #{tpu_custom_call.1} parent=1 // pred_check
      _
    $region11: #{tpu_custom_call.1} parent=1 // pred_check_branch
      %21 = sbr.rel (0) target = $region13
    $region12: #{tpu_custom_call.1} parent=1 // pred_region
      _
    $region13: #{tpu_custom_call.1} parent=1 // pred_fallthru
      _
    // Predicated region
    $region14: #{tpu_custom_call.1} parent=1 // pred_check
      _
    $region15: #{tpu_custom_call.1} parent=1 // pred_check_branch
      %23 = sbr.rel (0) target = $region17
    $region16: #{tpu_custom_call.1} parent=1 // pred_region
      _
    $region17: #{tpu_custom_call.1} parent=1 // pred_fallthru
      _
    // Predicated region
    $region18: #{tpu_custom_call.1} parent=1 // pred_check
      _
    $region19: #{tpu_custom_call.1} parent=1 // pred_check_branch
      %25 = sbr.rel (0) target = $region21
    $region20: #{tpu_custom_call.1} parent=1 // pred_region
      _
    $region21: #{tpu_custom_call.1} parent=1 // pred_fallthru
      _
    // Predicated region
    $region22: #{tpu_custom_call.1} parent=1 // pred_check
      _
    $region23: #{tpu_custom_call.1} parent=1 // pred_check_branch
      %27 = sbr.rel (0) target = $region25
    $region24: #{tpu_custom_call.1} parent=1 // pred_region
      %s29 = ssub.s32 2048, 2048
      %30 = vsyncadd [#allocation3], %s29
      %s31 = sshll.u32 [#allocation2], 4
      %s32 = int_to_ptr.vmem [resolvable:$true] %s31
      %37 = dma.hbm_to_vmem [thread:$0]  %s5, 2048, %s32, [#allocation3], 128, 128, 8
    $region25: #{tpu_custom_call.1} parent=1 // pred_fallthru
      _
    // Predicated region
    $region26: #{tpu_custom_call.1} parent=1 // pred_check
      _
    $region27: #{tpu_custom_call.1} parent=1 // pred_check_branch
      %39 = sbr.rel (0) target = $region29
    $region28: #{tpu_custom_call.1} parent=1 // pred_region
      _
    $region29: #{tpu_custom_call.1} parent=1 // pred_fallthru
      _
    // Predicated region
    $region30: #{tpu_custom_call.1} parent=1 // pred_check
      _
    $region31: #{tpu_custom_call.1} parent=1 // pred_check_branch
      %41 = sbr.rel (0) target = $region33
    $region32: #{tpu_custom_call.1} parent=1 // pred_region
      _
    $region33: #{tpu_custom_call.1} parent=1 // pred_fallthru
      _
    // Predicated region
    $region34: #{tpu_custom_call.1} parent=1 // pred_check
      _
    $region35: #{tpu_custom_call.1} parent=1 // pred_check_branch
      %43 = sbr.rel (0) target = $region37
    $region36: #{tpu_custom_call.1} parent=1 // pred_region
      _
    $region37: #{tpu_custom_call.1} parent=1 // pred_fallthru
      _
    // Predicated region
    $region38: #{tpu_custom_call.1} parent=1 // pred_check
      _
    $region39: #{tpu_custom_call.1} parent=1 // pred_check_branch
      %45 = sbr.rel (0) target = $region41
    $region40: #{tpu_custom_call.1} parent=1 // pred_region
      %46 = dma.done [#allocation3], 2048
    $region41: #{tpu_custom_call.1} parent=1 // pred_fallthru
      _
    %v47 = vld [vmem:[%s0] sm:$0xff]
    %v48 = vld [vmem:[%s1] sm:$0xff]
    %v49 = vld [vmem:[%s1 + $0x8] sm:$0xff]
    %v50 = vld [vmem:[%s2] sm:$0x1]
    %v52 = vlaneseq
    %v53 = vshrl.u32 %v52, 7
    %v54 = vsub.s32 0, %v53
    %v55 = vrot.slane %v50, %v54
    %vm57 = vcmask 130048
    %v59 = vsel %vm57, %v47, 0
    %61 = vmatprep.subr.mxu0 0.0
    %62 = vmatpush1.msra.mxu0 0.0
    %63 = vmatprep.subr.mxu0 0.0
    %64 = vmatpush1.msra.mxu0 0.0
    %65 = vmatprep.subr.mxu0 0.0
    %66 = vmatpush1.msra.mxu0 0.0
    %67 = vmatprep.subr.mxu0 0.0
    %68 = vmatpush1.msra.mxu0 0.0
    %69 = vmatprep.subr.mxu0 0.0
    %70 = vmatpush1.msra.mxu0 0.0
    %71 = vmatprep.subr.mxu0 0.0
    %72 = vmatpush1.msra.mxu0 0.0
    %73 = vmatprep.subr.mxu0 0.0
    %74 = vmatpush1.msra.mxu0 0.0
    %75 = vmatprep.subr.mxu0 0.0
    %76 = vmatpush1.msra.mxu0 0.0
    %77 = vmatprep.subr.mxu0 0.0
    %78 = vmatpush1.msra.mxu0 0.0
    %79 = vmatprep.subr.mxu0 0.0
    %80 = vmatpush1.msra.mxu0 0.0
    %81 = vmatprep.subr.mxu0 0.0
    %82 = vmatpush1.msra.mxu0 0.0
    %83 = vmatprep.subr.mxu0 0.0
    %84 = vmatpush1.msra.mxu0 0.0
    %85 = vmatprep.subr.mxu0 0.0
    %86 = vmatpush1.msra.mxu0 0.0
    %87 = vmatprep.subr.mxu0 0.0
    %88 = vmatpush1.msra.mxu0 0.0
    %89 = vmatprep.subr.mxu0 0.0
    %90 = vmatpush1.msra.mxu0 %v49
    %91 = vmatprep.subr.mxu0 0.0
    %92 = vmatpush1.msra.mxu0 %v48
    %93 = vmatprep.subr.mxu0 0.0
    %94 = vmatpush2.msra.mxu0 0.0
    %95 = vmatprep.subr.mxu0 0.0
    %96 = vmatpush2.msra.mxu0 0.0
    %97 = vmatprep.subr.mxu0 0.0
    %98 = vmatpush2.msra.mxu0 0.0
    %99 = vmatprep.subr.mxu0 0.0
    %100 = vmatpush2.msra.mxu0 0.0
    %101 = vmatprep.subr.mxu0 0.0
    %102 = vmatpush2.msra.mxu0 0.0
    %103 = vmatprep.subr.mxu0 0.0
    %104 = vmatpush2.msra.mxu0 0.0
    %105 = vmatprep.subr.mxu0 0.0
    %106 = vmatpush2.msra.mxu0 0.0
    %107 = vmatprep.subr.mxu0 0.0
    %108 = vmatpush2.msra.mxu0 0.0
    %109 = vmatprep.subr.mxu0 0.0
    %110 = vmatpush2.msra.mxu0 0.0
    %111 = vmatprep.subr.mxu0 0.0
    %112 = vmatpush2.msra.mxu0 0.0
    %113 = vmatprep.subr.mxu0 0.0
    %114 = vmatpush2.msra.mxu0 0.0
    %115 = vmatprep.subr.mxu0 0.0
    %116 = vmatpush2.msra.mxu0 0.0
    %117 = vmatprep.subr.mxu0 0.0
    %118 = vmatpush2.msra.mxu0 0.0
    %119 = vmatprep.subr.mxu0 0.0
    %120 = vmatpush2.msra.mxu0 0.0
    %121 = vmatprep.subr.mxu0 0.0
    %122 = vmatpush2.msra.mxu0 0.0
    %123 = vmatprep.subr.mxu0 0.0
    %124 = vmatpush2.msra.mxu0 0.0
    %125 = vmatprep.mubr.f32.mxu0 0.0
    %126 = vmatmul.mubr.f32.gmra.mxu0 %v59
    %v127 = vpop.f32.mrf.mxu0
    %v128 = vadd.f32 %v55, %v127
    %v129 = vpop.f32.mrf.mxu0
    %130 = vdwg.mxu0
    %v131 = vmul.f32 %v128, 0.5
    %v132 = vmul.f32 %v128, 0.70710677
    %v133 = verf.f32.pop %v132
    %v134 = vadd.f32 %v133, 1.0
    %v135 = vmul.f32 %v131, %v134
    %v136 = vld [vmem:[%s3] sm:$0xff]
    %v137 = vld [vmem:[%s3 + $0x8] sm:$0xff]
    %v138 = vld [vmem:[%s3 + $0x10] sm:$0xff]
    %v139 = vld [vmem:[%s3 + $0x18] sm:$0xff]
    %v140 = vld [vmem:[%s3 + $0x20] sm:$0xff]
    %v141 = vld [vmem:[%s3 + $0x28] sm:$0xff]
    %v142 = vld [vmem:[%s3 + $0x30] sm:$0xff]
    %v143 = vld [vmem:[%s3 + $0x38] sm:$0xff]
    %v144 = vld [vmem:[%s3 + $0x40] sm:$0xff]
    %v145 = vld [vmem:[%s3 + $0x48] sm:$0xff]
    %v146 = vld [vmem:[%s3 + $0x50] sm:$0xff]
    %v147 = vld [vmem:[%s3 + $0x58] sm:$0xff]
    %v148 = vld [vmem:[%s3 + $0x60] sm:$0xff]
    %v149 = vld [vmem:[%s3 + $0x68] sm:$0xff]
    %v150 = vld [vmem:[%s3 + $0x70] sm:$0xff]
    %v151 = vld [vmem:[%s3 + $0x78] sm:$0xff]
    %v152 = vld [vmem:[%s4] sm:$0x1]
    %v154 = vlaneseq
    %v155 = vshrl.u32 %v154, 7
    %v156 = vsub.s32 0, %v155
    %v157 = vrot.slane %v152, %v156
    %159 = vmatprep.subr.mxu0 0.0
    %160 = vmatpush1.msra.mxu0 %v151
    %161 = vmatprep.subr.mxu0 0.0
    %162 = vmatpush1.msra.mxu0 %v150
    %163 = vmatprep.subr.mxu0 0.0
    %164 = vmatpush1.msra.mxu0 %v149
    %165 = vmatprep.subr.mxu0 0.0
    %166 = vmatpush1.msra.mxu0 %v148
    %167 = vmatprep.subr.mxu0 0.0
    %168 = vmatpush1.msra.mxu0 %v147
    %169 = vmatprep.subr.mxu0 0.0
    %170 = vmatpush1.msra.mxu0 %v146
    %171 = vmatprep.subr.mxu0 0.0
    %172 = vmatpush1.msra.mxu0 %v145
    %173 = vmatprep.subr.mxu0 0.0
    %174 = vmatpush1.msra.mxu0 %v144
    %175 = vmatprep.subr.mxu0 0.0
    %176 = vmatpush1.msra.mxu0 %v143
    %177 = vmatprep.subr.mxu0 0.0
    %178 = vmatpush1.msra.mxu0 %v142
    %179 = vmatprep.subr.mxu0 0.0
    %180 = vmatpush1.msra.mxu0 %v141
    %181 = vmatprep.subr.mxu0 0.0
    %182 = vmatpush1.msra.mxu0 %v140
    %183 = vmatprep.subr.mxu0 0.0
    %184 = vmatpush1.msra.mxu0 %v139
    %185 = vmatprep.subr.mxu0 0.0
    %186 = vmatpush1.msra.mxu0 %v138
    %187 = vmatprep.subr.mxu0 0.0
    %188 = vmatpush1.msra.mxu0 %v137
    %189 = vmatprep.subr.mxu0 0.0
    %190 = vmatpush1.msra.mxu0 %v136
    %191 = vmatprep.subr.mxu0 0.0
    %192 = vmatpush2.msra.mxu0 0.0
    %193 = vmatprep.subr.mxu0 0.0
    %194 = vmatpush2.msra.mxu0 0.0
    %195 = vmatprep.subr.mxu0 0.0
    %196 = vmatpush2.msra.mxu0 0.0
    %197 = vmatprep.subr.mxu0 0.0
    %198 = vmatpush2.msra.mxu0 0.0
    %199 = vmatprep.subr.mxu0 0.0
    %200 = vmatpush2.msra.mxu0 0.0
    %201 = vmatprep.subr.mxu0 0.0
    %202 = vmatpush2.msra.mxu0 0.0
    %203 = vmatprep.subr.mxu0 0.0
    %204 = vmatpush2.msra.mxu0 0.0
    %205 = vmatprep.subr.mxu0 0.0
    %206 = vmatpush2.msra.mxu0 0.0
    %207 = vmatprep.subr.mxu0 0.0
    %208 = vmatpush2.msra.mxu0 0.0
    %209 = vmatprep.subr.mxu0 0.0
    %210 = vmatpush2.msra.mxu0 0.0
    %211 = vmatprep.subr.mxu0 0.0
    %212 = vmatpush2.msra.mxu0 0.0
    %213 = vmatprep.subr.mxu0 0.0
    %214 = vmatpush2.msra.mxu0 0.0
    %215 = vmatprep.subr.mxu0 0.0
    %216 = vmatpush2.msra.mxu0 0.0
    %217 = vmatprep.subr.mxu0 0.0
    %218 = vmatpush2.msra.mxu0 0.0
    %219 = vmatprep.subr.mxu0 0.0
    %220 = vmatpush2.msra.mxu0 0.0
    %221 = vmatprep.subr.mxu0 0.0
    %222 = vmatpush2.msra.mxu0 0.0
    %223 = vmatprep.mubr.f32.mxu0 0.0
    %224 = vmatmul.mubr.f32.gmra.mxu0 %v135
    %v225 = vpop.f32.mrf.mxu0
    %v226 = vadd.f32 %v157, %v225
    %v227 = vpop.f32.mrf.mxu0
    %228 = vdwg.mxu0
    %v229 = vmul.f32 %v226, 0.5
    %v230 = vmul.f32 %v226, 0.70710677
    %v231 = verf.f32.pop %v230
    %v232 = vadd.f32 %v231, 1.0
    %v233 = vmul.f32 %v229, %v232
    %v234 = vld [vmem:[#allocation2] sm:$0xff]
    %v235 = vld [vmem:[#allocation2 + $0x8] sm:$0xff]
    %v236 = vld [vmem:[#allocation2 + $0x10] sm:$0xff]
    %v237 = vld [vmem:[#allocation2 + $0x18] sm:$0xff]
    %v238 = vld [vmem:[#allocation2 + $0x20] sm:$0xff]
    %v239 = vld [vmem:[#allocation2 + $0x28] sm:$0xff]
    %v240 = vld [vmem:[#allocation2 + $0x30] sm:$0xff]
    %v241 = vld [vmem:[#allocation2 + $0x38] sm:$0xff]
    %v242 = vld [vmem:[#allocation2 + $0x40] sm:$0xff]
    %v243 = vld [vmem:[#allocation2 + $0x48] sm:$0xff]
    %v244 = vld [vmem:[#allocation2 + $0x50] sm:$0xff]
    %v245 = vld [vmem:[#allocation2 + $0x58] sm:$0xff]
    %v246 = vld [vmem:[#allocation2 + $0x60] sm:$0xff]
    %v247 = vld [vmem:[#allocation2 + $0x68] sm:$0xff]
    %v248 = vld [vmem:[#allocation2 + $0x70] sm:$0xff]
    %v249 = vld [vmem:[#allocation2 + $0x78] sm:$0xff]
    %v250 = vld [vmem:[%s6] sm:$0x1]
    %v252 = vlaneseq
    %v253 = vshrl.u32 %v252, 7
    %v254 = vsub.s32 0, %v253
    %v255 = vrot.slane %v250, %v254
    %257 = vmatprep.subr.mxu0 0.0
    %258 = vmatpush1.msra.mxu0 %v249
    %259 = vmatprep.subr.mxu0 0.0
    %260 = vmatpush1.msra.mxu0 %v248
    %261 = vmatprep.subr.mxu0 0.0
    %262 = vmatpush1.msra.mxu0 %v247
    %263 = vmatprep.subr.mxu0 0.0
    %264 = vmatpush1.msra.mxu0 %v246
    %265 = vmatprep.subr.mxu0 0.0
    %266 = vmatpush1.msra.mxu0 %v245
    %267 = vmatprep.subr.mxu0 0.0
    %268 = vmatpush1.msra.mxu0 %v244
    %269 = vmatprep.subr.mxu0 0.0
    %270 = vmatpush1.msra.mxu0 %v243
    %271 = vmatprep.subr.mxu0 0.0
    %272 = vmatpush1.msra.mxu0 %v242
    %273 = vmatprep.subr.mxu0 0.0
    %274 = vmatpush1.msra.mxu0 %v241
    %275 = vmatprep.subr.mxu0 0.0
    %276 = vmatpush1.msra.mxu0 %v240
    %277 = vmatprep.subr.mxu0 0.0
    %278 = vmatpush1.msra.mxu0 %v239
    %279 = vmatprep.subr.mxu0 0.0
    %280 = vmatpush1.msra.mxu0 %v238
    %281 = vmatprep.subr.mxu0 0.0
    %282 = vmatpush1.msra.mxu0 %v237
    %283 = vmatprep.subr.mxu0 0.0
    %284 = vmatpush1.msra.mxu0 %v236
    %285 = vmatprep.subr.mxu0 0.0
    %286 = vmatpush1.msra.mxu0 %v235
    %287 = vmatprep.subr.mxu0 0.0
    %288 = vmatpush1.msra.mxu0 %v234
    %289 = vmatprep.subr.mxu0 0.0
    %290 = vmatpush2.msra.mxu0 0.0
    %291 = vmatprep.subr.mxu0 0.0
    %292 = vmatpush2.msra.mxu0 0.0
    %293 = vmatprep.subr.mxu0 0.0
    %294 = vmatpush2.msra.mxu0 0.0
    %295 = vmatprep.subr.mxu0 0.0
    %296 = vmatpush2.msra.mxu0 0.0
    %297 = vmatprep.subr.mxu0 0.0
    %298 = vmatpush2.msra.mxu0 0.0
    %299 = vmatprep.subr.mxu0 0.0
    %300 = vmatpush2.msra.mxu0 0.0
    %301 = vmatprep.subr.mxu0 0.0
    %302 = vmatpush2.msra.mxu0 0.0
    %303 = vmatprep.subr.mxu0 0.0
    %304 = vmatpush2.msra.mxu0 0.0
    %305 = vmatprep.subr.mxu0 0.0
    %306 = vmatpush2.msra.mxu0 0.0
    %307 = vmatprep.subr.mxu0 0.0
    %308 = vmatpush2.msra.mxu0 0.0
    %309 = vmatprep.subr.mxu0 0.0
    %310 = vmatpush2.msra.mxu0 0.0
    %311 = vmatprep.subr.mxu0 0.0
    %312 = vmatpush2.msra.mxu0 0.0
    %313 = vmatprep.subr.mxu0 0.0
    %314 = vmatpush2.msra.mxu0 0.0
    %315 = vmatprep.subr.mxu0 0.0
    %316 = vmatpush2.msra.mxu0 0.0
    %317 = vmatprep.subr.mxu0 0.0
    %318 = vmatpush2.msra.mxu0 0.0
    %319 = vmatprep.subr.mxu0 0.0
    %320 = vmatpush2.msra.mxu0 0.0
    %321 = vmatprep.mubr.f32.mxu0 0.0
    %322 = vmatmul.mubr.f32.gmra.mxu0 %v233
    %v323 = vpop.f32.mrf.mxu0
    %v324 = vadd.f32 %v255, %v323
    %v325 = vpop.f32.mrf.mxu0
    %326 = vdwg.mxu0
    %v327 = vmul.f32 %v324, 0.5
    %v328 = vmul.f32 %v324, 0.70710677
    %v329 = verf.f32.pop %v328
    %v330 = vadd.f32 %v329, 1.0
    %v331 = vmul.f32 %v327, %v330
    %v332 = vadd.f32 %v331, %v135
    %v333 = vld [vmem:[%s7] sm:$0xff]
    %v334 = vld [vmem:[%s7 + $0x8] sm:$0xff]
    %v335 = vld [vmem:[%s7 + $0x10] sm:$0xff]
    %v336 = vld [vmem:[%s7 + $0x18] sm:$0xff]
    %v337 = vld [vmem:[%s7 + $0x20] sm:$0xff]
    %v338 = vld [vmem:[%s7 + $0x28] sm:$0xff]
    %v339 = vld [vmem:[%s7 + $0x30] sm:$0xff]
    %v340 = vld [vmem:[%s7 + $0x38] sm:$0xff]
    %v341 = vld [vmem:[%s7 + $0x40] sm:$0xff]
    %v342 = vld [vmem:[%s7 + $0x48] sm:$0xff]
    %v343 = vld [vmem:[%s7 + $0x50] sm:$0xff]
    %v344 = vld [vmem:[%s7 + $0x58] sm:$0xff]
    %v345 = vld [vmem:[%s7 + $0x60] sm:$0xff]
    %v346 = vld [vmem:[%s7 + $0x68] sm:$0xff]
    %v347 = vld [vmem:[%s7 + $0x70] sm:$0xff]
    %v348 = vld [vmem:[%s7 + $0x78] sm:$0xff]
    %v349 = vld [vmem:[%s8] sm:$0x1]
    %v351 = vlaneseq
    %v352 = vshrl.u32 %v351, 7
    %v353 = vsub.s32 0, %v352
    %v354 = vrot.slane %v349, %v353
    %356 = vmatprep.subr.mxu0 0.0
    %357 = vmatpush1.msra.mxu0 %v348
    %358 = vmatprep.subr.mxu0 0.0
    %359 = vmatpush1.msra.mxu0 %v347
    %360 = vmatprep.subr.mxu0 0.0
    %361 = vmatpush1.msra.mxu0 %v346
    %362 = vmatprep.subr.mxu0 0.0
    %363 = vmatpush1.msra.mxu0 %v345
    %364 = vmatprep.subr.mxu0 0.0
    %365 = vmatpush1.msra.mxu0 %v344
    %366 = vmatprep.subr.mxu0 0.0
    %367 = vmatpush1.msra.mxu0 %v343
    %368 = vmatprep.subr.mxu0 0.0
    %369 = vmatpush1.msra.mxu0 %v342
    %370 = vmatprep.subr.mxu0 0.0
    %371 = vmatpush1.msra.mxu0 %v341
    %372 = vmatprep.subr.mxu0 0.0
    %373 = vmatpush1.msra.mxu0 %v340
    %374 = vmatprep.subr.mxu0 0.0
    %375 = vmatpush1.msra.mxu0 %v339
    %376 = vmatprep.subr.mxu0 0.0
    %377 = vmatpush1.msra.mxu0 %v338
    %378 = vmatprep.subr.mxu0 0.0
    %379 = vmatpush1.msra.mxu0 %v337
    %380 = vmatprep.subr.mxu0 0.0
    %381 = vmatpush1.msra.mxu0 %v336
    %382 = vmatprep.subr.mxu0 0.0
    %383 = vmatpush1.msra.mxu0 %v335
    %384 = vmatprep.subr.mxu0 0.0
    %385 = vmatpush1.msra.mxu0 %v334
    %386 = vmatprep.subr.mxu0 0.0
    %387 = vmatpush1.msra.mxu0 %v333
    %388 = vmatprep.subr.mxu0 0.0
    %389 = vmatpush2.msra.mxu0 0.0
    %390 = vmatprep.subr.mxu0 0.0
    %391 = vmatpush2.msra.mxu0 0.0
    %392 = vmatprep.subr.mxu0 0.0
    %393 = vmatpush2.msra.mxu0 0.0
    %394 = vmatprep.subr.mxu0 0.0
    %395 = vmatpush2.msra.mxu0 0.0
    %396 = vmatprep.subr.mxu0 0.0
    %397 = vmatpush2.msra.mxu0 0.0
    %398 = vmatprep.subr.mxu0 0.0
    %399 = vmatpush2.msra.mxu0 0.0
    %400 = vmatprep.subr.mxu0 0.0
    %401 = vmatpush2.msra.mxu0 0.0
    %402 = vmatprep.subr.mxu0 0.0
    %403 = vmatpush2.msra.mxu0 0.0
    %404 = vmatprep.subr.mxu0 0.0
    %405 = vmatpush2.msra.mxu0 0.0
    %406 = vmatprep.subr.mxu0 0.0
    %407 = vmatpush2.msra.mxu0 0.0
    %408 = vmatprep.subr.mxu0 0.0
    %409 = vmatpush2.msra.mxu0 0.0
    %410 = vmatprep.subr.mxu0 0.0
    %411 = vmatpush2.msra.mxu0 0.0
    %412 = vmatprep.subr.mxu0 0.0
    %413 = vmatpush2.msra.mxu0 0.0
    %414 = vmatprep.subr.mxu0 0.0
    %415 = vmatpush2.msra.mxu0 0.0
    %416 = vmatprep.subr.mxu0 0.0
    %417 = vmatpush2.msra.mxu0 0.0
    %418 = vmatprep.subr.mxu0 0.0
    %419 = vmatpush2.msra.mxu0 0.0
    %420 = vmatprep.mubr.f32.mxu0 0.0
    %421 = vmatmul.mubr.f32.gmra.mxu0 %v332
    %v422 = vpop.f32.mrf.mxu0
    %v423 = vadd.f32 %v354, %v422
    %v424 = vpop.f32.mrf.mxu0
    %425 = vdwg.mxu0
    %vm426 = vcmask 523264
    %427 = vst.msk [vmem:[#allocation5] sm:$0xff] %vm426, %v423
    // Predicated region
    $region42: #{tpu_custom_call.1} parent=1 // pred_check
      _
    $region43: #{tpu_custom_call.1} parent=1 // pred_check_branch
      %429 = sbr.rel (0) target = $region45
    $region44: #{tpu_custom_call.1} parent=1 // pred_region
      %s431 = ssub.s32 128, 64
      %432 = vsyncadd [#allocation4], %s431
      %s433 = sshll.u32 [#allocation5], 4
      %s434 = int_to_ptr.vmem [resolvable:$true] %s433
      %439 = dma.vmem_to_hbm [thread:$0]  %s434, 64, %s9, [#allocation4], 64, 64, 4
    $region45: #{tpu_custom_call.1} parent=1 // pred_fallthru
      _
    // Predicated region
    $region46: #{tpu_custom_call.1} parent=1 // pred_check
      _
    $region47: #{tpu_custom_call.1} parent=1 // pred_check_branch
      %441 = sbr.rel (0) target = $region49
    $region48: #{tpu_custom_call.1} parent=1 // pred_region
      %442 = dma.done [#allocation4], 128
    $region49: #{tpu_custom_call.1} parent=1 // pred_fallthru
      _
    %443 = vsyncpa [#allocation3], 1
    %444 = vsyncpa [#allocation4], 1

</llo_original>
